<compile_context>
chip_gen: v5e
topology: v5e:2x2
jax: 0.10.0
libtpu: 0.0.40
codegen_flags: <defaults>
</compile_context>

<pallas_src>
import jax
import jax.numpy as jnp
from jax.experimental import pallas as pl
from jax.experimental.pallas import tpu as pltpu


def _round_up(x, m):
    return (x + m - 1) // m * m


def light_graph_conv_kernel(a_ref, f_ref, cj_ref, ci_ref, o_ref):
    """Grid step (dst tile i, feat tile j, src tile k).  o_ref is the f32
    accumulator, resident across the innermost k axis."""
    k = pl.program_id(2)

    @pl.when(k == 0)
    def _():
        o_ref[...] = jnp.zeros_like(o_ref)

    # Fold the per-source normalization (dropout already baked into cj) into
    # the adjacency tile: A is 0/1 (exact in bf16), cj row is f32, product is
    # rounded once to bf16 for the MXU.  Each (i, k) A block is unique, so the
    # scale is applied exactly once (unlike scaling the feature tile, which
    # would be redone for every dst tile).
    a_scaled = (a_ref[...] * cj_ref[...]).astype(jnp.bfloat16)     # (tm, tk)

    # aggregation: sum over neighbors == A_tile @ feats_tile (f32 accumulate)
    o_ref[...] += jnp.dot(a_scaled, f_ref[...],
                          preferred_element_type=jnp.float32)

    @pl.when(k == pl.num_programs(2) - 1)
    def _():
        # destination normalization:  out_i = agg_i * ci_i
        o_ref[...] = o_ref[...] * ci_ref[...]


def light_graph_conv(adj, src_feats, cj, ci, *, drop_out=0.1, dropout_key=None,
                     training=True, tm=256, tk=2048):
    """Pallas LightGraphConv forward.

    adj       : (n_dst, n_src) float 0/1 dense adjacency (edge j -> i).
    src_feats : (n_src, d) float source node features.
    cj        : (n_src, 1) float out-degree(src)^(-1/2).
    ci        : (n_dst, 1) float in-degree(dst)^(-1/2).
    Returns (n_dst, d) float32.
    """
    n_dst, n_src = adj.shape
    n_src2, d = src_feats.shape
    assert n_src == n_src2
    assert cj.shape == (n_src, 1) and ci.shape == (n_dst, 1)

    # Neighborhood dropout on cj (tiny (n_src, 1) vector -> plain-JAX glue;
    # inverted dropout exactly like nn.Dropout in training mode).
    cj = cj.astype(jnp.float32)
    if training and drop_out > 0.0:
        keep = jax.random.bernoulli(dropout_key, 1.0 - drop_out, cj.shape)
        cj = jnp.where(keep, cj / (1.0 - drop_out), 0.0).astype(jnp.float32)
    cj_row = cj.reshape(1, n_src)                    # lane-dense layout
    ci = ci.astype(jnp.float32)

    # ---- tile sizing (clamped to the padded problem dims) -----------------
    d_pad = _round_up(d, 128)                        # lane-dense output
    tn = d_pad                                       # full feature width per tile
    tm = _round_up(min(tm, _round_up(n_dst, 8)), 8)
    m_pad = _round_up(n_dst, tm)
    tk = _round_up(min(tk, _round_up(n_src, 128)), 128)
    k_pad = _round_up(n_src, tk)

    # ---- zero-pad to exact tile multiples (zeros contribute nothing) ------
    if (m_pad, k_pad) != (n_dst, n_src):
        adj = jnp.pad(adj, ((0, m_pad - n_dst), (0, k_pad - n_src)))
    if (k_pad, d_pad) != (n_src, d):
        src_feats = jnp.pad(src_feats, ((0, k_pad - n_src), (0, d_pad - d)))
    if k_pad != n_src:
        cj_row = jnp.pad(cj_row, ((0, 0), (0, k_pad - n_src)))
    if m_pad != n_dst:
        ci = jnp.pad(ci, ((0, m_pad - n_dst), (0, 0)))

    # bf16 operands: halves HBM traffic of the dominant A stream (0/1 -> exact)
    # and puts the matmul on the native bf16 MXU path.
    adj_bf = adj.astype(jnp.bfloat16)
    feats_bf = src_feats.astype(jnp.bfloat16)

    grid = (m_pad // tm, d_pad // tn, k_pad // tk)

    out = pl.pallas_call(
        light_graph_conv_kernel,
        out_shape=jax.ShapeDtypeStruct((m_pad, d_pad), jnp.float32),
        grid_spec=pltpu.PrefetchScalarGridSpec(
            num_scalar_prefetch=0,
            grid=grid,
            in_specs=[
                pl.BlockSpec((tm, tk), lambda i, j, k: (i, k)),   # adjacency (bf16)
                pl.BlockSpec((tk, tn), lambda i, j, k: (k, j)),   # src feats (bf16)
                pl.BlockSpec((1, tk), lambda i, j, k: (0, k)),    # cj row (f32, lane-dense)
                pl.BlockSpec((tm, 1), lambda i, j, k: (i, 0)),    # ci (f32)
            ],
            out_specs=pl.BlockSpec((tm, tn), lambda i, j, k: (i, j)),
        ),
        compiler_params=pltpu.CompilerParams(
            dimension_semantics=("parallel", "parallel", "arbitrary")),
    )(adj_bf, feats_bf, cj_row, ci)

    if (m_pad, d_pad) != (n_dst, d):
        out = out[:n_dst, :d]
    return out


if __name__ == "__main__":
    key = jax.random.PRNGKey(0)
    k_adj, k_feat, k_drop = jax.random.split(key, 3)

    # Small bipartite graph: 256 source nodes (e.g. cells), 64 destination
    # nodes (e.g. genes), 128-dim features.
    n_src, n_dst, d = 256, 64, 128

    adj = jax.random.bernoulli(k_adj, 0.15, (n_dst, n_src)).astype(jnp.float32)
    src_feats = jax.random.normal(k_feat, (n_src, d), dtype=jnp.float32)

    # Degree-based normalizers (deg^(-1/2), guarded against zero degree).
    deg_src = jnp.maximum(adj.sum(axis=0), 1.0)   # out-degree of sources
    deg_dst = jnp.maximum(adj.sum(axis=1), 1.0)   # in-degree of destinations
    cj = (deg_src ** -0.5).reshape(n_src, 1).astype(jnp.float32)
    ci = (deg_dst ** -0.5).reshape(n_dst, 1).astype(jnp.float32)

    drop_out = 0.1
    out = light_graph_conv(adj, src_feats, cj, ci,
                           drop_out=drop_out, dropout_key=k_drop, training=True)
    jax.block_until_ready(out)
    assert out.shape == (n_dst, d) and out.dtype == jnp.float32

    # Matched-precision reference: same dropout mask, same bf16 rounding of the
    # scaled adjacency and of the features, f32 accumulation.
    keep = jax.random.bernoulli(k_drop, 1.0 - drop_out, cj.shape)
    cj_dropped = jnp.where(keep, cj / (1.0 - drop_out), 0.0)
    a_w = (adj * cj_dropped.reshape(1, n_src)).astype(jnp.bfloat16).astype(jnp.float32)
    f_bf = src_feats.astype(jnp.bfloat16).astype(jnp.float32)
    ref = (a_w @ f_bf) * ci

    err = float(jnp.max(jnp.abs(out - ref)))
    assert jnp.allclose(out, ref, atol=1e-3, rtol=1e-3), f"max abs err = {err}"

    print("KERNEL_OK")
</pallas_src>

<mosaic_0001>
module attributes {stable_mosaic.version = 11 : i64} {
  func.func @light_graph_conv_kernel(%arg0: i32, %arg1: i32, %arg2: i32, %arg3: memref<64x256xbf16, #tpu.memory_space<vmem>>, %arg4: memref<256x128xbf16, #tpu.memory_space<vmem>>, %arg5: memref<1x256xf32, #tpu.memory_space<vmem>>, %arg6: memref<64x1xf32, #tpu.memory_space<vmem>>, %arg7: memref<64x128xf32, #tpu.memory_space<vmem>>) attributes {dimension_semantics = [#tpu.dimension_semantics<parallel>, #tpu.dimension_semantics<parallel>, #tpu.dimension_semantics<arbitrary>], iteration_bounds = array<i64: 1, 1, 1>, scalar_prefetch = 0 : i64, scratch_operands = 0 : i64, tpu.core_type = #tpu.core_type<tc>, window_params = [{transform_indices = @transform_0, window_bounds = array<i64: 64, 256>}, {transform_indices = @transform_1, window_bounds = array<i64: 256, 128>}, {transform_indices = @transform_2, window_bounds = array<i64: 1, 256>}, {transform_indices = @transform_3, window_bounds = array<i64: 64, 1>}, {transform_indices = @transform_4, window_bounds = array<i64: 64, 128>}]} {
    %c0_i32 = arith.constant 0 : i32
    %0 = arith.cmpi eq, %arg2, %c0_i32 : i32
    %1 = arith.extui %0 : i1 to i32
    %c0_i32_0 = arith.constant 0 : i32
    %2 = arith.cmpi ne, %1, %c0_i32_0 : i32
    scf.if %2 {
      %cst_12 = arith.constant 0.000000e+00 : f32
      %17 = vector.broadcast %cst_12 : f32 to vector<64x128xf32>
      %c0_13 = arith.constant 0 : index
      %c0_14 = arith.constant 0 : index
      %18 = vector.load %arg7[%c0_13, %c0_14] : memref<64x128xf32, #tpu.memory_space<vmem>>, vector<64x128xf32>
      tpu.vector_store %arg7[%c0_13, %c0_14], %17 {strides = array<i32>} : memref<64x128xf32, #tpu.memory_space<vmem>>, vector<64x128xf32>,
    } else {
    }
    %c0 = arith.constant 0 : index
    %c0_1 = arith.constant 0 : index
    %3 = vector.load %arg3[%c0, %c0_1] : memref<64x256xbf16, #tpu.memory_space<vmem>>, vector<64x256xbf16>
    %c0_2 = arith.constant 0 : index
    %c0_3 = arith.constant 0 : index
    %4 = vector.load %arg5[%c0_2, %c0_3] : memref<1x256xf32, #tpu.memory_space<vmem>>, vector<1x256xf32>
    %5 = arith.extf %3 : vector<64x256xbf16> to vector<64x256xf32>
    %6 = vector.broadcast %4 : vector<1x256xf32> to vector<64x256xf32>
    %7 = arith.mulf %5, %6 : vector<64x256xf32>
    %8 = arith.truncf %7 : vector<64x256xf32> to vector<64x256xbf16>
    %c0_4 = arith.constant 0 : index
    %c0_5 = arith.constant 0 : index
    %9 = vector.load %arg7[%c0_4, %c0_5] : memref<64x128xf32, #tpu.memory_space<vmem>>, vector<64x128xf32>
    %c0_6 = arith.constant 0 : index
    %c0_7 = arith.constant 0 : index
    %10 = vector.load %arg4[%c0_6, %c0_7] : memref<256x128xbf16, #tpu.memory_space<vmem>>, vector<256x128xbf16>
    %cst = arith.constant dense<0.000000e+00> : vector<64x128xf32>
    %11 = tpu.matmul %8, %10, %cst {dimension_numbers = #tpu.dot_dimension_numbers<[1], [0], [0], [1], [0, 0, 1, 1], [], []>} : vector<64x256xbf16>, vector<256x128xbf16>, vector<64x128xf32> -> vector<64x128xf32>
    %12 = arith.addf %9, %11 : vector<64x128xf32>
    %c0_8 = arith.constant 0 : index
    %c0_9 = arith.constant 0 : index
    %13 = vector.load %arg7[%c0_8, %c0_9] : memref<64x128xf32, #tpu.memory_space<vmem>>, vector<64x128xf32>
    tpu.vector_store %arg7[%c0_8, %c0_9], %12 {strides = array<i32>} : memref<64x128xf32, #tpu.memory_space<vmem>>, vector<64x128xf32>,
    %c0_i32_10 = arith.constant 0 : i32
    %14 = arith.cmpi eq, %arg2, %c0_i32_10 : i32
    %15 = arith.extui %14 : i1 to i32
    %c0_i32_11 = arith.constant 0 : i32
    %16 = arith.cmpi ne, %15, %c0_i32_11 : i32
    scf.if %16 {
      %c0_12 = arith.constant 0 : index
      %c0_13 = arith.constant 0 : index
      %17 = vector.load %arg7[%c0_12, %c0_13] : memref<64x128xf32, #tpu.memory_space<vmem>>, vector<64x128xf32>
      %c0_14 = arith.constant 0 : index
      %c0_15 = arith.constant 0 : index
      %18 = vector.load %arg6[%c0_14, %c0_15] : memref<64x1xf32, #tpu.memory_space<vmem>>, vector<64x1xf32>
      %19 = vector.broadcast %18 : vector<64x1xf32> to vector<64x128xf32>
      %20 = arith.mulf %17, %19 : vector<64x128xf32>
      %c0_16 = arith.constant 0 : index
      %c0_17 = arith.constant 0 : index
      %21 = vector.load %arg7[%c0_16, %c0_17] : memref<64x128xf32, #tpu.memory_space<vmem>>, vector<64x128xf32>
      tpu.vector_store %arg7[%c0_16, %c0_17], %20 {strides = array<i32>} : memref<64x128xf32, #tpu.memory_space<vmem>>, vector<64x128xf32>,
    } else {
    }
    return
  }
  func.func @transform_0(%arg0: i32, %arg1: i32, %arg2: i32) -> (i32, i32) {
    %c0_i32 = arith.constant 0 : i32
    return %arg0, %arg2 : i32, i32
  }
  func.func @transform_1(%arg0: i32, %arg1: i32, %arg2: i32) -> (i32, i32) {
    %c0_i32 = arith.constant 0 : i32
    return %arg2, %arg1 : i32, i32
  }
  func.func @transform_2(%arg0: i32, %arg1: i32, %arg2: i32) -> (i32, i32) {
    %c0_i32 = arith.constant 0 : i32
    %c0_i32_0 = arith.constant 0 : i32
    return %c0_i32, %arg2 : i32, i32
  }
  func.func @transform_3(%arg0: i32, %arg1: i32, %arg2: i32) -> (i32, i32) {
    %c0_i32 = arith.constant 0 : i32
    %c0_i32_0 = arith.constant 0 : i32
    return %arg0, %c0_i32 : i32, i32
  }
  func.func @transform_4(%arg0: i32, %arg1: i32, %arg2: i32) -> (i32, i32) {
    %c0_i32 = arith.constant 0 : i32
    return %arg0, %arg1 : i32, i32
  }
}

</mosaic_0001>

<llo_original>
// kernel: tpu_custom_call.1
$region0: #{tpu_custom_call.1}
  #allocation0 [shape = 'u32[]', space=smem, size = 0x4, offset = 0x4, fixed_abs, tag = 'smem constant byte address 0x4 - core index']
  #allocation1 [shape = 'u32[72,128]{1,0:T(1,128)}', space=vmem, size = 0x9000, scoped, tag = 'internal scratch']
  %s0 = inlined_call_operand.vmem [shape: bf16[64,256], index: 0, kind: input, shape index: {}]
  %s1 = inlined_call_operand.hbm [shape: bf16[256,128], index: 1, kind: input, shape index: {}]
  %s2 = inlined_call_operand.hbm [shape: f32[1,256], index: 2, kind: input, shape index: {}]
  %s3 = inlined_call_operand.vmem [shape: f32[64,1], index: 3, kind: input, shape index: {}]
  %s4 = inlined_call_operand.hbm [shape: f32[64,128], index: 4, kind: output, shape index: {}]
  %s5 = sld [smem:[#allocation0]]
  $region42: #{tpu_custom_call.1} parent=0
    _
  %s7 = ssub.s32 1, %s5
  %s8 = scalar_select 0, %s7, %s5
  $region1: #{tpu_custom_call.1} parent=0
    #allocation2 [shape = 'u8[65536]{0}', space=vmem, size = 0x10000, scoped, tag = 'input window, operand 1, single buffered']
    #allocation3 [shape = 's32[1]{0}', space=sflag, size = 0x4, scoped, tag = 'scoped memory for tpu_custom_call.1']
    #allocation4 [shape = 's32[1]{0}', space=sflag, size = 0x4, scoped, tag = 'scoped memory for tpu_custom_call.1']
    #allocation5 [shape = 'u8[1024]{0}', space=vmem, size = 0x400, scoped, tag = 'input window, operand 2, single buffered']
    #allocation6 [shape = 's32[1]{0}', space=sflag, size = 0x4, scoped, tag = 'scoped memory for tpu_custom_call.1']
    #allocation7 [shape = 'u8[32768]{0}', space=vmem, size = 0x8000, scoped, tag = 'output window, operand 0, single buffered']
    %9 = vsyncpa [#allocation3], 0
    %10 = vsyncpa [#allocation6], 0
    %11 = vsyncpa [#allocation4], 0
    // Predicated region
    $region2: #{tpu_custom_call.1} parent=1 // pred_check
      _
    $region3: #{tpu_custom_call.1} parent=1 // pred_check_branch
      %13 = sbr.rel (0) target = $region5
    $region4: #{tpu_custom_call.1} parent=1 // pred_region
      _
    $region5: #{tpu_custom_call.1} parent=1 // pred_fallthru
      _
    // Predicated region
    $region6: #{tpu_custom_call.1} parent=1 // pred_check
      _
    $region7: #{tpu_custom_call.1} parent=1 // pred_check_branch
      %15 = sbr.rel (0) target = $region9
    $region8: #{tpu_custom_call.1} parent=1 // pred_region
      %17 = vsyncadd [#allocation3], 0
      %s18 = sshll.u32 %s1, 4
      %s19 = int_to_ptr.hbm [resolvable:$true] %s18
      %s20 = sshll.u32 [#allocation2], 4
      %s21 = int_to_ptr.vmem [resolvable:$true] %s20
      %26 = dma.hbm_to_vmem [thread:$0]  %s19, 2048, %s21, [#allocation3], 64, 64, 4
    $region9: #{tpu_custom_call.1} parent=1 // pred_fallthru
      _
    // Predicated region
    $region10: #{tpu_custom_call.1} parent=1 // pred_check
      _
    $region11: #{tpu_custom_call.1} parent=1 // pred_check_branch
      %28 = sbr.rel (0) target = $region13
    $region12: #{tpu_custom_call.1} parent=1 // pred_region
      %30 = vsyncadd [#allocation6], 0
      %s32 = sshll.u32 %s2, 4
      %s33 = int_to_ptr.hbm [resolvable:$true] %s32
      %s34 = sshll.u32 [#allocation5], 4
      %s35 = int_to_ptr.vmem [resolvable:$true] %s34
      %37 = dma.hbm_to_vmem [thread:$0]  %s33, 32, %s35, [#allocation6]
    $region13: #{tpu_custom_call.1} parent=1 // pred_fallthru
      _
    // Predicated region
    $region14: #{tpu_custom_call.1} parent=1 // pred_check
      _
    $region15: #{tpu_custom_call.1} parent=1 // pred_check_branch
      %39 = sbr.rel (0) target = $region17
    $region16: #{tpu_custom_call.1} parent=1 // pred_region
      _
    $region17: #{tpu_custom_call.1} parent=1 // pred_fallthru
      _
    // Predicated region
    $region18: #{tpu_custom_call.1} parent=1 // pred_check
      _
    $region19: #{tpu_custom_call.1} parent=1 // pred_check_branch
      %41 = sbr.rel (0) target = $region21
    $region20: #{tpu_custom_call.1} parent=1 // pred_region
      %43 = dma.done [#allocation3], 2048
    $region21: #{tpu_custom_call.1} parent=1 // pred_fallthru
      _
    // Predicated region
    $region22: #{tpu_custom_call.1} parent=1 // pred_check
      _
    $region23: #{tpu_custom_call.1} parent=1 // pred_check_branch
      %45 = sbr.rel (0) target = $region25
    $region24: #{tpu_custom_call.1} parent=1 // pred_region
      %47 = dma.done [#allocation6], 32
    $region25: #{tpu_custom_call.1} parent=1 // pred_fallthru
      _
    %p48 = scmp.eq.s32.totalorder 0, 0
    // Predicated region
    $region26: #{tpu_custom_call.1} parent=1 // pred_check
      %p49 = pneg %p48
    $region27: #{tpu_custom_call.1} parent=1 // pred_check_branch
      %51 = sbr.rel (%p49) target = $region29
    $region28: #{tpu_custom_call.1} parent=1 // pred_region
      %52 = vst [vmem:[#allocation7] sm:$0xff] 0.0
      %53 = vst [vmem:[#allocation7 + $0x8] sm:$0xff] 0.0
      %54 = vst [vmem:[#allocation7 + $0x10] sm:$0xff] 0.0
      %55 = vst [vmem:[#allocation7 + $0x18] sm:$0xff] 0.0
      %56 = vst [vmem:[#allocation7 + $0x20] sm:$0xff] 0.0
      %57 = vst [vmem:[#allocation7 + $0x28] sm:$0xff] 0.0
      %58 = vst [vmem:[#allocation7 + $0x30] sm:$0xff] 0.0
      %59 = vst [vmem:[#allocation7 + $0x38] sm:$0xff] 0.0
    $region29: #{tpu_custom_call.1} parent=1 // pred_fallthru
      _
    %v60 = vld [vmem:[%s0] sm:$0xff]
    %v61 = vld [vmem:[%s0 + $0x8] sm:$0xff]
    %v62 = vld [vmem:[%s0 + $0x10] sm:$0xff]
    %v63 = vld [vmem:[%s0 + $0x18] sm:$0xff]
    %v64 = vld [vmem:[%s0 + $0x20] sm:$0xff]
    %v65 = vld [vmem:[%s0 + $0x28] sm:$0xff]
    %v66 = vld [vmem:[%s0 + $0x30] sm:$0xff]
    %v67 = vld [vmem:[%s0 + $0x38] sm:$0xff]
    %v68 = vld [vmem:[#allocation5] sm:$0x3]
    %v69 = vunpack.c.l.bf16 %v60
    %v70 = vunpack.c.h.bf16 %v60
    %v71 = vunpack.c.l.bf16 %v61
    %v72 = vunpack.c.h.bf16 %v61
    %v73 = vunpack.c.l.bf16 %v62
    %v74 = vunpack.c.h.bf16 %v62
    %v75 = vunpack.c.l.bf16 %v63
    %v76 = vunpack.c.h.bf16 %v63
    %v77 = vunpack.c.l.bf16 %v64
    %v78 = vunpack.c.h.bf16 %v64
    %v79 = vunpack.c.l.bf16 %v65
    %v80 = vunpack.c.h.bf16 %v65
    %v81 = vunpack.c.l.bf16 %v66
    %v82 = vunpack.c.h.bf16 %v66
    %v83 = vunpack.c.l.bf16 %v67
    %v84 = vunpack.c.h.bf16 %v67
    %v86 = vperm.slane %v68, 0
    %v87 = vperm.slane %v68, 1
    %v90 = vmul.f32 %v69, %v86
    %v91 = vmul.f32 %v70, %v87
    %v92 = vmul.f32 %v71, %v86
    %v93 = vmul.f32 %v72, %v87
    %v94 = vmul.f32 %v73, %v86
    %v95 = vmul.f32 %v74, %v87
    %v96 = vmul.f32 %v75, %v86
    %v97 = vmul.f32 %v76, %v87
    %v98 = vmul.f32 %v77, %v86
    %v99 = vmul.f32 %v78, %v87
    %v100 = vmul.f32 %v79, %v86
    %v101 = vmul.f32 %v80, %v87
    %v102 = vmul.f32 %v81, %v86
    %v103 = vmul.f32 %v82, %v87
    %v104 = vmul.f32 %v83, %v86
    %v105 = vmul.f32 %v84, %v87
    %v106 = vpack.c.bf16 %v92, %v90
    %v107 = vpack.c.bf16 %v93, %v91
    %v108 = vpack.c.bf16 %v96, %v94
    %v109 = vpack.c.bf16 %v97, %v95
    %v110 = vpack.c.bf16 %v100, %v98
    %v111 = vpack.c.bf16 %v101, %v99
    %v112 = vpack.c.bf16 %v104, %v102
    %v113 = vpack.c.bf16 %v105, %v103
    %v114 = vld [vmem:[#allocation7] sm:$0xff]
    %v115 = vld [vmem:[#allocation7 + $0x8] sm:$0xff]
    %v116 = vld [vmem:[#allocation7 + $0x10] sm:$0xff]
    %v117 = vld [vmem:[#allocation7 + $0x18] sm:$0xff]
    %v118 = vld [vmem:[#allocation7 + $0x20] sm:$0xff]
    %v119 = vld [vmem:[#allocation7 + $0x28] sm:$0xff]
    %v120 = vld [vmem:[#allocation7 + $0x30] sm:$0xff]
    %v121 = vld [vmem:[#allocation7 + $0x38] sm:$0xff]
    %v122 = vld [vmem:[#allocation2] sm:$0xf]
    %v123 = vld [vmem:[#allocation2 + $0x4] sm:$0xf]
    %v124 = vld [vmem:[#allocation2 + $0x8] sm:$0xf]
    %v125 = vld [vmem:[#allocation2 + $0xc] sm:$0xf]
    %v126 = vld [vmem:[#allocation2 + $0x10] sm:$0xf]
    %v127 = vld [vmem:[#allocation2 + $0x14] sm:$0xf]
    %v128 = vld [vmem:[#allocation2 + $0x18] sm:$0xf]
    %v129 = vld [vmem:[#allocation2 + $0x1c] sm:$0xf]
    %v130 = vld [vmem:[#allocation2 + $0x20] sm:$0xf]
    %v131 = vld [vmem:[#allocation2 + $0x24] sm:$0xf]
    %v132 = vld [vmem:[#allocation2 + $0x28] sm:$0xf]
    %v133 = vld [vmem:[#allocation2 + $0x2c] sm:$0xf]
    %v134 = vld [vmem:[#allocation2 + $0x30] sm:$0xf]
    %v135 = vld [vmem:[#allocation2 + $0x34] sm:$0xf]
    %v136 = vld [vmem:[#allocation2 + $0x38] sm:$0xf]
    %v137 = vld [vmem:[#allocation2 + $0x3c] sm:$0xf]
    %v138 = vld [vmem:[#allocation2 + $0x40] sm:$0xf]
    %v139 = vld [vmem:[#allocation2 + $0x44] sm:$0xf]
    %v140 = vld [vmem:[#allocation2 + $0x48] sm:$0xf]
    %v141 = vld [vmem:[#allocation2 + $0x4c] sm:$0xf]
    %v142 = vld [vmem:[#allocation2 + $0x50] sm:$0xf]
    %v143 = vld [vmem:[#allocation2 + $0x54] sm:$0xf]
    %v144 = vld [vmem:[#allocation2 + $0x58] sm:$0xf]
    %v145 = vld [vmem:[#allocation2 + $0x5c] sm:$0xf]
    %v146 = vld [vmem:[#allocation2 + $0x60] sm:$0xf]
    %v147 = vld [vmem:[#allocation2 + $0x64] sm:$0xf]
    %v148 = vld [vmem:[#allocation2 + $0x68] sm:$0xf]
    %v149 = vld [vmem:[#allocation2 + $0x6c] sm:$0xf]
    %v150 = vld [vmem:[#allocation2 + $0x70] sm:$0xf]
    %v151 = vld [vmem:[#allocation2 + $0x74] sm:$0xf]
    %v152 = vld [vmem:[#allocation2 + $0x78] sm:$0xf]
    %v153 = vld [vmem:[#allocation2 + $0x7c] sm:$0xf]
    %v186 = vunpack.c.l.b16 %v122
    %v187 = vunpack.c.l.b16 %v123
    %v188 = vunpack.c.l.b16 %v124
    %v189 = vunpack.c.l.b16 %v125
    %v190 = vunpack.c.l.b16 %v126
    %v191 = vunpack.c.l.b16 %v127
    %v192 = vunpack.c.l.b16 %v128
    %v193 = vunpack.c.l.b16 %v129
    %v194 = vunpack.c.l.b16 %v130
    %v195 = vunpack.c.l.b16 %v131
    %v196 = vunpack.c.l.b16 %v132
    %v197 = vunpack.c.l.b16 %v133
    %v198 = vunpack.c.l.b16 %v134
    %v199 = vunpack.c.l.b16 %v135
    %v200 = vunpack.c.l.b16 %v136
    %v201 = vunpack.c.l.b16 %v137
    %v202 = vunpack.c.l.b16 %v138
    %v203 = vunpack.c.l.b16 %v139
    %v204 = vunpack.c.l.b16 %v140
    %v205 = vunpack.c.l.b16 %v141
    %v206 = vunpack.c.l.b16 %v142
    %v207 = vunpack.c.l.b16 %v143
    %v208 = vunpack.c.l.b16 %v144
    %v209 = vunpack.c.l.b16 %v145
    %v210 = vunpack.c.l.b16 %v146
    %v211 = vunpack.c.l.b16 %v147
    %v212 = vunpack.c.l.b16 %v148
    %v213 = vunpack.c.l.b16 %v149
    %v214 = vunpack.c.l.b16 %v150
    %v215 = vunpack.c.l.b16 %v151
    %v216 = vunpack.c.l.b16 %v152
    %v217 = vunpack.c.l.b16 %v153
    %v218 = vpack.c.b16 %v187, %v186
    %v219 = vpack.c.b16 %v189, %v188
    %v220 = vpack.c.b16 %v191, %v190
    %v221 = vpack.c.b16 %v193, %v192
    %v222 = vpack.c.b16 %v195, %v194
    %v223 = vpack.c.b16 %v197, %v196
    %v224 = vpack.c.b16 %v199, %v198
    %v225 = vpack.c.b16 %v201, %v200
    %v226 = vpack.c.b16 %v203, %v202
    %v227 = vpack.c.b16 %v205, %v204
    %v228 = vpack.c.b16 %v207, %v206
    %v229 = vpack.c.b16 %v209, %v208
    %v230 = vpack.c.b16 %v211, %v210
    %v231 = vpack.c.b16 %v213, %v212
    %v232 = vpack.c.b16 %v215, %v214
    %v233 = vpack.c.b16 %v217, %v216
    %250 = vmatpush.bf16.msra.mxu0 %v225
    %251 = vmatpush.bf16.msra.mxu0 %v224
    %252 = vmatpush.bf16.msra.mxu0 %v223
    %253 = vmatpush.bf16.msra.mxu0 %v222
    %254 = vmatpush.bf16.msra.mxu0 %v221
    %255 = vmatpush.bf16.msra.mxu0 %v220
    %256 = vmatpush.bf16.msra.mxu0 %v219
    %257 = vmatpush.bf16.msra.mxu0 %v218
    %258 = vmatmul.bf16.gmra.mxu0 %v106
    %v259 = vpop.f32.mrf.mxu0
    %v260 = vadd.f32 0.0, %v259
    %v261 = vpop.f32.mrf.mxu0
    %v262 = vadd.f32 0.0, %v261
    %263 = vmatmul.bf16.gmra.mxu0 %v108
    %v264 = vpop.f32.mrf.mxu0
    %v265 = vadd.f32 0.0, %v264
    %v266 = vpop.f32.mrf.mxu0
    %v267 = vadd.f32 0.0, %v266
    %268 = vmatmul.bf16.gmra.mxu0 %v110
    %v269 = vpop.f32.mrf.mxu0
    %v270 = vadd.f32 0.0, %v269
    %v271 = vpop.f32.mrf.mxu0
    %v272 = vadd.f32 0.0, %v271
    %273 = vmatmul.bf16.gmra.mxu0 %v112
    %v274 = vpop.f32.mrf.mxu0
    %v275 = vadd.f32 0.0, %v274
    %v276 = vpop.f32.mrf.mxu0
    %v277 = vadd.f32 0.0, %v276
    %278 = vdwg.mxu0
    %279 = vmatpush.bf16.msra.mxu0 %v233
    %280 = vmatpush.bf16.msra.mxu0 %v232
    %281 = vmatpush.bf16.msra.mxu0 %v231
    %282 = vmatpush.bf16.msra.mxu0 %v230
    %283 = vmatpush.bf16.msra.mxu0 %v229
    %284 = vmatpush.bf16.msra.mxu0 %v228
    %285 = vmatpush.bf16.msra.mxu0 %v227
    %286 = vmatpush.bf16.msra.mxu0 %v226
    %287 = vmatmul.bf16.gmra.mxu0 %v107
    %v288 = vpop.f32.mrf.mxu0
    %v289 = vadd.f32 %v260, %v288
    %v290 = vpop.f32.mrf.mxu0
    %v291 = vadd.f32 %v262, %v290
    %292 = vmatmul.bf16.gmra.mxu0 %v109
    %v293 = vpop.f32.mrf.mxu0
    %v294 = vadd.f32 %v265, %v293
    %v295 = vpop.f32.mrf.mxu0
    %v296 = vadd.f32 %v267, %v295
    %297 = vmatmul.bf16.gmra.mxu0 %v111
    %v298 = vpop.f32.mrf.mxu0
    %v299 = vadd.f32 %v270, %v298
    %v300 = vpop.f32.mrf.mxu0
    %v301 = vadd.f32 %v272, %v300
    %302 = vmatmul.bf16.gmra.mxu0 %v113
    %v303 = vpop.f32.mrf.mxu0
    %v304 = vadd.f32 %v275, %v303
    %v305 = vpop.f32.mrf.mxu0
    %v306 = vadd.f32 %v277, %v305
    %307 = vdwg.mxu0
    %v308 = vadd.f32 %v114, %v289
    %v309 = vadd.f32 %v115, %v291
    %v310 = vadd.f32 %v116, %v294
    %v311 = vadd.f32 %v117, %v296
    %v312 = vadd.f32 %v118, %v299
    %v313 = vadd.f32 %v119, %v301
    %v314 = vadd.f32 %v120, %v304
    %v315 = vadd.f32 %v121, %v306
    %316 = vst [vmem:[#allocation7] sm:$0xff] %v308
    %317 = vst [vmem:[#allocation7 + $0x8] sm:$0xff] %v309
    %318 = vst [vmem:[#allocation7 + $0x10] sm:$0xff] %v310
    %319 = vst [vmem:[#allocation7 + $0x18] sm:$0xff] %v311
    %320 = vst [vmem:[#allocation7 + $0x20] sm:$0xff] %v312
    %321 = vst [vmem:[#allocation7 + $0x28] sm:$0xff] %v313
    %322 = vst [vmem:[#allocation7 + $0x30] sm:$0xff] %v314
    %323 = vst [vmem:[#allocation7 + $0x38] sm:$0xff] %v315
    // Predicated region
    $region30: #{tpu_custom_call.1} parent=1 // pred_check
      %p324 = pneg %p48
    $region31: #{tpu_custom_call.1} parent=1 // pred_check_branch
      %326 = sbr.rel (%p324) target = $region33
    $region32: #{tpu_custom_call.1} parent=1 // pred_region
      %v327 = vld [vmem:[#allocation7] sm:$0xff]
      %v328 = vld [vmem:[#allocation7 + $0x8] sm:$0xff]
      %v329 = vld [vmem:[#allocation7 + $0x10] sm:$0xff]
      %v330 = vld [vmem:[#allocation7 + $0x18] sm:$0xff]
      %v331 = vld [vmem:[#allocation7 + $0x20] sm:$0xff]
      %v332 = vld [vmem:[#allocation7 + $0x28] sm:$0xff]
      %v333 = vld [vmem:[#allocation7 + $0x30] sm:$0xff]
      %v334 = vld [vmem:[#allocation7 + $0x38] sm:$0xff]
      %v335 = vld [vmem:[%s3] sm:$0xff]
      %v336 = vld [vmem:[%s3 + $0x8] sm:$0xff]
      %v337 = vld [vmem:[%s3 + $0x10] sm:$0xff]
      %v338 = vld [vmem:[%s3 + $0x18] sm:$0xff]
      %v339 = vld [vmem:[%s3 + $0x20] sm:$0xff]
      %v340 = vld [vmem:[%s3 + $0x28] sm:$0xff]
      %v341 = vld [vmem:[%s3 + $0x30] sm:$0xff]
      %v342 = vld [vmem:[%s3 + $0x38] sm:$0xff]
      %344 = vset.pattern.permute.xlu0 0
      %345 = vperm.xlu0 %344, %v335
      %v346 = vpop.permute.xlu0 %345
      %349 = vset.pattern.permute.xlu0 0
      %350 = vperm.xlu0 %349, %v336
      %v351 = vpop.permute.xlu0 %350
      %354 = vset.pattern.permute.xlu0 0
      %355 = vperm.xlu0 %354, %v337
      %v356 = vpop.permute.xlu0 %355
      %359 = vset.pattern.permute.xlu0 0
      %360 = vperm.xlu0 %359, %v338
      %v361 = vpop.permute.xlu0 %360
      %364 = vset.pattern.permute.xlu0 0
      %365 = vperm.xlu0 %364, %v339
      %v366 = vpop.permute.xlu0 %365
      %369 = vset.pattern.permute.xlu0 0
      %370 = vperm.xlu0 %369, %v340
      %v371 = vpop.permute.xlu0 %370
      %374 = vset.pattern.permute.xlu0 0
      %375 = vperm.xlu0 %374, %v341
      %v376 = vpop.permute.xlu0 %375
      %379 = vset.pattern.permute.xlu0 0
      %380 = vperm.xlu0 %379, %v342
      %v381 = vpop.permute.xlu0 %380
      %v383 = vmul.f32 %v327, %v346
      %v384 = vmul.f32 %v328, %v351
      %v385 = vmul.f32 %v329, %v356
      %v386 = vmul.f32 %v330, %v361
      %v387 = vmul.f32 %v331, %v366
      %v388 = vmul.f32 %v332, %v371
      %v389 = vmul.f32 %v333, %v376
      %v390 = vmul.f32 %v334, %v381
      %391 = vst [vmem:[#allocation7] sm:$0xff] %v383
      %392 = vst [vmem:[#allocation7 + $0x8] sm:$0xff] %v384
      %393 = vst [vmem:[#allocation7 + $0x10] sm:$0xff] %v385
      %394 = vst [vmem:[#allocation7 + $0x18] sm:$0xff] %v386
      %395 = vst [vmem:[#allocation7 + $0x20] sm:$0xff] %v387
      %396 = vst [vmem:[#allocation7 + $0x28] sm:$0xff] %v388
      %397 = vst [vmem:[#allocation7 + $0x30] sm:$0xff] %v389
      %398 = vst [vmem:[#allocation7 + $0x38] sm:$0xff] %v390
    $region33: #{tpu_custom_call.1} parent=1 // pred_fallthru
      _
    // Predicated region
    $region34: #{tpu_custom_call.1} parent=1 // pred_check
      _
    $region35: #{tpu_custom_call.1} parent=1 // pred_check_branch
      %400 = sbr.rel (0) target = $region37
    $region36: #{tpu_custom_call.1} parent=1 // pred_region
      %402 = vsyncadd [#allocation4], 0
      %s403 = sshll.u32 [#allocation7], 4
      %s404 = int_to_ptr.vmem [resolvable:$true] %s403
      %s405 = sshll.u32 %s4, 4
      %s406 = int_to_ptr.hbm [resolvable:$true] %s405
      %411 = dma.vmem_to_hbm [thread:$0]  %s404, 1024, %s406, [#allocation4], 128, 128, 8
    $region37: #{tpu_custom_call.1} parent=1 // pred_fallthru
      _
    // Predicated region
    $region38: #{tpu_custom_call.1} parent=1 // pred_check
      _
    $region39: #{tpu_custom_call.1} parent=1 // pred_check_branch
      %413 = sbr.rel (0) target = $region41
    $region40: #{tpu_custom_call.1} parent=1 // pred_region
      %415 = dma.done [#allocation4], 1024
    $region41: #{tpu_custom_call.1} parent=1 // pred_fallthru
      _
    %416 = vsyncpa [#allocation3], 1
    %417 = vsyncpa [#allocation6], 1
    %418 = vsyncpa [#allocation4], 1

</llo_original>
